<compile_context>
chip_gen: v7x
topology: tpu7x:2x2x1
jax: 0.10.0
libtpu: 0.0.40
codegen_flags: <defaults>
</compile_context>

<pallas_src>
import jax
import jax.numpy as jnp
from jax.experimental import pallas as pl
from jax.experimental.pallas import tpu as pltpu


H1, H2 = 134, 67          # true hidden widths (must match the PyTorch module)
H1P, H2P = 256, 128       # lane-aligned (multiple of 128) padded widths


def _round_up(n, m):
    return ((n + m - 1) // m) * m


# ----------------------------------------------------------------------------
# Kernel: fused 3-layer MLP on one batch tile
# ----------------------------------------------------------------------------
def critic_kernel(xu_ref, w1_ref, b1_ref, w2_ref, b2_ref, w3_ref, b3_ref,
                  out_ref):
    cd = w2_ref.dtype                                  # compute (MXU) dtype

    # Layer 1: single fused dot over the (state|action) concat.
    h1 = jnp.dot(xu_ref[...], w1_ref[...],
                 preferred_element_type=jnp.float32) + b1_ref[...]
    h1 = jnp.maximum(h1, 0.0)                          # ReLU (f32, VPU)

    # Layer 2.
    h2 = jnp.dot(h1.astype(cd), w2_ref[...],
                 preferred_element_type=jnp.float32) + b2_ref[...]
    h2 = jnp.maximum(h2, 0.0)                          # ReLU

    # Layer 3 (out_features = 1): VPU multiply + lane reduce instead of an
    # MXU pass that would fill a single output column.  w3 is already f32.
    q = jnp.sum(h2 * w3_ref[...], axis=-1, keepdims=True) + b3_ref[0]
    out_ref[...] = q.astype(out_ref.dtype)             # [TM, 1]


# ----------------------------------------------------------------------------
# One-time parameter preparation (outside the hot path)
# ----------------------------------------------------------------------------
def prepare_critic_params(params, param_dtype=jnp.bfloat16):
    """Transpose to [in, out], zero-pad input/hidden widths to aligned sizes
    and cast matmul weights to param_dtype.  W1 stays a single matrix so the
    kernel does ONE layer-1 dot."""
    w1, b1, w2, b2, w3, b3 = params                    # PyTorch layout
    K = w1.shape[1]                                    # state_dim + action_dim
    KP = _round_up(K, 8)
    w1p = jnp.pad(w1.T, ((0, KP - K), (0, H1P - H1))).astype(param_dtype)
    b1p = jnp.pad(b1, (0, H1P - H1)).reshape(1, H1P).astype(jnp.float32)
    w2p = jnp.pad(w2.T, ((0, H1P - H1), (0, H2P - H2))).astype(param_dtype)
    b2p = jnp.pad(b2, (0, H2P - H2)).reshape(1, H2P).astype(jnp.float32)
    w3p = jnp.pad(w3.reshape(1, H2),
                  ((0, 0), (0, H2P - H2))).astype(jnp.float32)   # f32 on VPU
    b3s = b3.reshape(1).astype(jnp.float32)            # scalar -> SMEM
    return (w1p, b1p, w2p, b2p, w3p, b3s)


# ----------------------------------------------------------------------------
# Wrapper
# ----------------------------------------------------------------------------
def critic_forward(x, u, prep, tm=1024):
    """x: [B, state_dim], u: [B, action_dim]. Returns [B, 1] float32."""
    w1, b1, w2, b2, w3, b3 = prep
    B, S = x.shape
    A = u.shape[1]
    K = S + A
    KP = w1.shape[0]                                   # round_up(K, 8)

    # Grid shaping: pick the step count first.  >= 2 steps whenever the batch
    # is big enough so dimension_semantics=("parallel",) actually spreads the
    # work over both v7x TensorCores; then the smallest 8-aligned tile for
    # that step count (pads by at most 7 rows per tile).
    nb = max(1, pl.cdiv(B, tm))
    if nb == 1 and B >= 16:
        nb = 2
    TM = _round_up(max(pl.cdiv(B, nb), 8), 8)
    Bp = nb * TM

    xu = jnp.concatenate([x, u], axis=1)               # [B, K]
    if Bp != B or KP != K:
        xu = jnp.pad(xu, ((0, Bp - B), (0, KP - K)))
    xu = xu.astype(w1.dtype)                           # cast once, not per tile

    out = pl.pallas_call(
        critic_kernel,
        out_shape=jax.ShapeDtypeStruct((Bp, 1), jnp.float32),
        grid=(nb,),
        in_specs=[
            pl.BlockSpec((TM, KP), lambda i: (i, 0)),          # xu tile
            pl.BlockSpec((KP, H1P), lambda i: (0, 0)),         # W1 (resident)
            pl.BlockSpec((1, H1P), lambda i: (0, 0)),          # b1
            pl.BlockSpec((H1P, H2P), lambda i: (0, 0)),        # W2 (resident)
            pl.BlockSpec((1, H2P), lambda i: (0, 0)),          # b2
            pl.BlockSpec((1, H2P), lambda i: (0, 0)),          # w3 row (f32)
            pl.BlockSpec(memory_space=pltpu.MemorySpace.SMEM),  # b3 scalar
        ],
        out_specs=pl.BlockSpec((TM, 1), lambda i: (i, 0)),
        compiler_params=pltpu.CompilerParams(
            dimension_semantics=("parallel",)),   # 2-TC sharding on v7x
    )(xu, w1, b1, w2, b2, w3, b3)

    return out[:B] if Bp != B else out


# ----------------------------------------------------------------------------
# Deterministic init (matches nn.Linear default: U(-1/sqrt(fan_in), +))
# ----------------------------------------------------------------------------
def init_critic_params(key, state_dim, action_dim):
    def linear_init(k, out_f, in_f):
        kw, kb = jax.random.split(k)
        bound = 1.0 / jnp.sqrt(jnp.float32(in_f))
        w = jax.random.uniform(kw, (out_f, in_f), jnp.float32, -bound, bound)
        b = jax.random.uniform(kb, (out_f,), jnp.float32, -bound, bound)
        return w, b

    k1, k2, k3 = jax.random.split(key, 3)
    w1, b1 = linear_init(k1, H1, state_dim + action_dim)
    w2, b2 = linear_init(k2, H2, H1)
    w3, b3 = linear_init(k3, 1, H2)
    return (w1, b1, w2, b2, w3, b3)


# Pure-JAX reference (compute_dtype lets us emulate the bf16 weight path).
def critic_ref(x, u, params, compute_dtype=jnp.float32):
    w1, b1, w2, b2, w3, b3 = params
    cd = compute_dtype

    def lin(a, w, b):
        return jnp.dot(a.astype(cd), w.T.astype(cd),
                       preferred_element_type=jnp.float32) + b

    xu = jnp.concatenate([x, u], axis=1)
    h1 = jax.nn.relu(lin(xu, w1, b1))
    h2 = jax.nn.relu(lin(h1, w2, b2))
    return lin(h2, w3, b3)


if __name__ == "__main__":
    state_dim, action_dim, batch = 16, 8, 8

    key = jax.random.PRNGKey(0)
    kp, kx, ku = jax.random.split(key, 3)
    params = init_critic_params(kp, state_dim, action_dim)
    x = jax.random.normal(kx, (batch, state_dim), jnp.float32)
    u = jax.random.normal(ku, (batch, action_dim), jnp.float32)

    # 1) f32-param path, tiny batch (single tile): near-exact vs. f32 ref.
    prep32 = prepare_critic_params(params, jnp.float32)
    out = jax.block_until_ready(critic_forward(x, u, prep32))
    ref = critic_ref(x, u, params, jnp.float32)
    assert out.shape == (batch, 1)
    assert jnp.allclose(out, ref, atol=1e-4, rtol=1e-4), (out, ref)

    # 2) f32-param path, ragged batch: exercises multi-tile grids, the
    #    padding-aware tile selection and the >=2-step (two-TC) split.
    B2 = 300
    kx2, ku2 = jax.random.split(jax.random.PRNGKey(1))
    x2 = jax.random.normal(kx2, (B2, state_dim), jnp.float32)
    u2 = jax.random.normal(ku2, (B2, action_dim), jnp.float32)
    ref2 = critic_ref(x2, u2, params, jnp.float32)
    out2a = jax.block_until_ready(critic_forward(x2, u2, prep32, tm=128))
    out2b = jax.block_until_ready(critic_forward(x2, u2, prep32))  # nb forced to 2
    assert out2a.shape == (B2, 1) and out2b.shape == (B2, 1)
    assert jnp.allclose(out2a, ref2, atol=1e-4, rtol=1e-4)
    assert jnp.allclose(out2b, ref2, atol=1e-4, rtol=1e-4)

    # 3) bf16-param fast path (default) vs. a bf16-emulating reference.
    prepbf = prepare_critic_params(params, jnp.bfloat16)
    out3 = jax.block_until_ready(critic_forward(x, u, prepbf))
    ref3 = critic_ref(x, u, params, jnp.bfloat16)
    assert out3.shape == (batch, 1)
    assert jnp.allclose(out3, ref3, atol=3e-2, rtol=3e-2), (out3, ref3)

    print("KERNEL_OK")
</pallas_src>

<mosaic_0001>
module attributes {stable_mosaic.version = 11 : i64} {
  func.func @critic_kernel(%arg0: i32, %arg1: memref<8x24xf32, #tpu.memory_space<vmem>>, %arg2: memref<24x256xf32, #tpu.memory_space<vmem>>, %arg3: memref<1x256xf32, #tpu.memory_space<vmem>>, %arg4: memref<256x128xf32, #tpu.memory_space<vmem>>, %arg5: memref<1x128xf32, #tpu.memory_space<vmem>>, %arg6: memref<1x128xf32, #tpu.memory_space<vmem>>, %arg7: memref<1xf32, #tpu.memory_space<smem>>, %arg8: memref<8x1xf32, #tpu.memory_space<vmem>>) attributes {dimension_semantics = [#tpu.dimension_semantics<parallel>], iteration_bounds = array<i64: 1>, scalar_prefetch = 0 : i64, scratch_operands = 0 : i64, tpu.core_type = #tpu.core_type<tc>, window_params = [{transform_indices = @transform_0, window_bounds = array<i64: 8, 24>}, {pipeline_mode = #tpu.pipeline_mode<synchronous>, transform_indices = @transform_1, window_bounds = array<i64: 24, 256>}, {pipeline_mode = #tpu.pipeline_mode<synchronous>, transform_indices = @transform_2, window_bounds = array<i64: 1, 256>}, {pipeline_mode = #tpu.pipeline_mode<synchronous>, transform_indices = @transform_3, window_bounds = array<i64: 256, 128>}, {pipeline_mode = #tpu.pipeline_mode<synchronous>, transform_indices = @transform_4, window_bounds = array<i64: 1, 128>}, {pipeline_mode = #tpu.pipeline_mode<synchronous>, transform_indices = @transform_5, window_bounds = array<i64: 1, 128>}, {transform_indices = @transform_6, window_bounds = array<i64: 1>}, {transform_indices = @transform_7, window_bounds = array<i64: 8, 1>}]} {
    %c0 = arith.constant 0 : index
    %c0_0 = arith.constant 0 : index
    %0 = vector.load %arg1[%c0, %c0_0] : memref<8x24xf32, #tpu.memory_space<vmem>>, vector<8x24xf32>
    %c0_1 = arith.constant 0 : index
    %c0_2 = arith.constant 0 : index
    %1 = vector.load %arg2[%c0_1, %c0_2] : memref<24x256xf32, #tpu.memory_space<vmem>>, vector<24x256xf32>
    %cst = arith.constant dense<0.000000e+00> : vector<8x256xf32>
    %2 = tpu.matmul %0, %1, %cst {dimension_numbers = #tpu.dot_dimension_numbers<[1], [0], [0], [1], [0, 0, 1, 1], [], []>} : vector<8x24xf32>, vector<24x256xf32>, vector<8x256xf32> -> vector<8x256xf32>
    %c0_3 = arith.constant 0 : index
    %c0_4 = arith.constant 0 : index
    %3 = vector.load %arg3[%c0_3, %c0_4] : memref<1x256xf32, #tpu.memory_space<vmem>>, vector<1x256xf32>
    %4 = vector.broadcast %3 : vector<1x256xf32> to vector<8x256xf32>
    %5 = arith.addf %2, %4 : vector<8x256xf32>
    %cst_5 = arith.constant 0.000000e+00 : f32
    %6 = vector.broadcast %cst_5 : f32 to vector<8x256xf32>
    %7 = arith.maximumf %5, %6 : vector<8x256xf32>
    %c0_6 = arith.constant 0 : index
    %c0_7 = arith.constant 0 : index
    %8 = vector.load %arg4[%c0_6, %c0_7] : memref<256x128xf32, #tpu.memory_space<vmem>>, vector<256x128xf32>
    %cst_8 = arith.constant dense<0.000000e+00> : vector<8x128xf32>
    %9 = tpu.matmul %7, %8, %cst_8 {dimension_numbers = #tpu.dot_dimension_numbers<[1], [0], [0], [1], [0, 0, 1, 1], [], []>} : vector<8x256xf32>, vector<256x128xf32>, vector<8x128xf32> -> vector<8x128xf32>
    %c0_9 = arith.constant 0 : index
    %c0_10 = arith.constant 0 : index
    %10 = vector.load %arg5[%c0_9, %c0_10] : memref<1x128xf32, #tpu.memory_space<vmem>>, vector<1x128xf32>
    %11 = vector.broadcast %10 : vector<1x128xf32> to vector<8x128xf32>
    %12 = arith.addf %9, %11 : vector<8x128xf32>
    %cst_11 = arith.constant 0.000000e+00 : f32
    %13 = vector.broadcast %cst_11 : f32 to vector<8x128xf32>
    %14 = arith.maximumf %12, %13 : vector<8x128xf32>
    %c0_12 = arith.constant 0 : index
    %c0_13 = arith.constant 0 : index
    %15 = vector.load %arg6[%c0_12, %c0_13] : memref<1x128xf32, #tpu.memory_space<vmem>>, vector<1x128xf32>
    %16 = vector.broadcast %15 : vector<1x128xf32> to vector<8x128xf32>
    %17 = arith.mulf %14, %16 : vector<8x128xf32>
    %cst_14 = arith.constant dense<0.000000e+00> : vector<8xf32>
    %18 = vector.multi_reduction <add>, %17, %cst_14 [1] : vector<8x128xf32> to vector<8xf32>
    %19 = vector.shape_cast %18 : vector<8xf32> to vector<8x1xf32>
    %c0_15 = arith.constant 0 : index
    %20 = memref.load %arg7[%c0_15] : memref<1xf32, #tpu.memory_space<smem>>
    %21 = vector.broadcast %20 : f32 to vector<8x1xf32>
    %22 = arith.addf %19, %21 : vector<8x1xf32>
    %c0_16 = arith.constant 0 : index
    %c0_17 = arith.constant 0 : index
    %23 = vector.load %arg8[%c0_16, %c0_17] : memref<8x1xf32, #tpu.memory_space<vmem>>, vector<8x1xf32>
    tpu.vector_store %arg8[%c0_16, %c0_17], %22 {strides = array<i32>} : memref<8x1xf32, #tpu.memory_space<vmem>>, vector<8x1xf32>,
    return
  }
  func.func @transform_0(%arg0: i32) -> (i32, i32) {
    %c0_i32 = arith.constant 0 : i32
    %c0_i32_0 = arith.constant 0 : i32
    return %arg0, %c0_i32 : i32, i32
  }
  func.func @transform_1(%arg0: i32) -> (i32, i32) {
    %c0_i32 = arith.constant 0 : i32
    %c0_i32_0 = arith.constant 0 : i32
    %c0_i32_1 = arith.constant 0 : i32
    return %c0_i32, %c0_i32_0 : i32, i32
  }
  func.func @transform_2(%arg0: i32) -> (i32, i32) {
    %c0_i32 = arith.constant 0 : i32
    %c0_i32_0 = arith.constant 0 : i32
    %c0_i32_1 = arith.constant 0 : i32
    return %c0_i32, %c0_i32_0 : i32, i32
  }
  func.func @transform_3(%arg0: i32) -> (i32, i32) {
    %c0_i32 = arith.constant 0 : i32
    %c0_i32_0 = arith.constant 0 : i32
    %c0_i32_1 = arith.constant 0 : i32
    return %c0_i32, %c0_i32_0 : i32, i32
  }
  func.func @transform_4(%arg0: i32) -> (i32, i32) {
    %c0_i32 = arith.constant 0 : i32
    %c0_i32_0 = arith.constant 0 : i32
    %c0_i32_1 = arith.constant 0 : i32
    return %c0_i32, %c0_i32_0 : i32, i32
  }
  func.func @transform_5(%arg0: i32) -> (i32, i32) {
    %c0_i32 = arith.constant 0 : i32
    %c0_i32_0 = arith.constant 0 : i32
    %c0_i32_1 = arith.constant 0 : i32
    return %c0_i32, %c0_i32_0 : i32, i32
  }
  func.func @transform_6(%arg0: i32) -> i32 {
    %c0_i32 = arith.constant 0 : i32
    %c0_i32_0 = arith.constant 0 : i32
    return %c0_i32 : i32
  }
  func.func @transform_7(%arg0: i32) -> (i32, i32) {
    %c0_i32 = arith.constant 0 : i32
    %c0_i32_0 = arith.constant 0 : i32
    return %arg0, %c0_i32 : i32, i32
  }
}

</mosaic_0001>

<llo_original>
// kernel: tpu_custom_call.1
$region0: #{tpu_custom_call.1}
  #allocation0 [shape = 'u32[]', space=smem, size = 0x4, offset = 0x4, fixed_abs, tag = 'smem constant byte address 0x4 - core index']
  #allocation1 [shape = 'u32[144,128]{1,0:T(1,128)}', space=vmem, size = 0x12000, scoped, tag = 'internal scratch']
  #allocation2 [shape = 'f32[1]{0:T(128)S(6)}', space=smem, size = 0x200, scoped, tag = 'scoped memory for tpu_custom_call.1']
  %s0 = inlined_call_operand.hbm [shape: f32[8,24], index: 0, kind: input, shape index: {}]
  %s1 = inlined_call_operand.hbm [shape: f32[24,256], index: 1, kind: input, shape index: {}]
  %s2 = inlined_call_operand.vmem [shape: f32[1,256], index: 2, kind: input, shape index: {}]
  %s3 = inlined_call_operand.hbm [shape: f32[256,128], index: 3, kind: input, shape index: {}]
  %s4 = inlined_call_operand.vmem [shape: f32[1,128], index: 4, kind: input, shape index: {}]
  %s5 = inlined_call_operand.vmem [shape: f32[1,128], index: 5, kind: input, shape index: {}]
  %s6 = inlined_call_operand.<no memory space> [shape: f32[1], index: 6, kind: input, shape index: {}]
  %s7 = inlined_call_operand.vmem [shape: f32[8,1], index: 7, kind: output, shape index: {}]
  %s8 = sld [smem:[#allocation0]]
  $region50: #{tpu_custom_call.1} parent=0
    _
  %s10 = ssub.s32 1, %s8
  %s11 = scalar_select 0, %s10, %s8
  %12 = sst [smem:[#allocation2]] %s6
  $region1: #{tpu_custom_call.1} parent=0
    #allocation3 [shape = 'u8[4096]{0}', space=vmem, size = 0x1000, scoped, tag = 'input window, operand 0, single buffered']
    #allocation4 [shape = 's32[1]{0}', space=sflag, size = 0x4, scoped, tag = 'scoped memory for tpu_custom_call.1']
    #allocation5 [shape = 'u8[24576]{0}', space=vmem, size = 0x6000, scoped, tag = 'input window, operand 1, single buffered']
    #allocation6 [shape = 's32[1]{0}', space=sflag, size = 0x4, scoped, tag = 'scoped memory for tpu_custom_call.1']
    #allocation7 [shape = 'u8[131072]{0}', space=vmem, size = 0x20000, scoped, tag = 'input window, operand 3, single buffered']
    %13 = vsyncpa [#allocation4], 0
    %14 = vsyncpa [#allocation6], 0
    // Predicated region
    $region2: #{tpu_custom_call.1} parent=1 // pred_check
      _
    $region3: #{tpu_custom_call.1} parent=1 // pred_check_branch
      %16 = sbr.rel (0) target = $region5
    $region4: #{tpu_custom_call.1} parent=1 // pred_region
      %s18 = ssub.s32 128, 128
      %19 = vsyncadd [#allocation4], %s18
      %s21 = sshll.u32 [#allocation3], 4
      %s22 = int_to_ptr.vmem [resolvable:$true] %s21
      %24 = dma.hbm_to_vmem [thread:$0]  %s0, 128, %s22, [#allocation4]
    $region5: #{tpu_custom_call.1} parent=1 // pred_fallthru
      _
    // Predicated region
    $region6: #{tpu_custom_call.1} parent=1 // pred_check
      _
    $region7: #{tpu_custom_call.1} parent=1 // pred_check_branch
      %26 = sbr.rel (0) target = $region9
    $region8: #{tpu_custom_call.1} parent=1 // pred_region
      %s28 = ssub.s32 768, 768
      %29 = vsyncadd [#allocation6], %s28
      %s30 = sshll.u32 [#allocation5], 4
      %s31 = int_to_ptr.vmem [resolvable:$true] %s30
      %36 = dma.hbm_to_vmem [thread:$0]  %s1, 768, %s31, [#allocation6], 256, 256, 16
    $region9: #{tpu_custom_call.1} parent=1 // pred_fallthru
      _
    // Predicated region
    $region10: #{tpu_custom_call.1} parent=1 // pred_check
      _
    $region11: #{tpu_custom_call.1} parent=1 // pred_check_branch
      %38 = sbr.rel (0) target = $region13
    $region12: #{tpu_custom_call.1} parent=1 // pred_region
      _
    $region13: #{tpu_custom_call.1} parent=1 // pred_fallthru
      _
    // Predicated region
    $region14: #{tpu_custom_call.1} parent=1 // pred_check
      _
    $region15: #{tpu_custom_call.1} parent=1 // pred_check_branch
      %40 = sbr.rel (0) target = $region17
    $region16: #{tpu_custom_call.1} parent=1 // pred_region
      %s42 = ssub.s32 4096, 4096
      %43 = vsyncadd [#allocation6], %s42
      %s44 = sshll.u32 [#allocation7], 4
      %s45 = int_to_ptr.vmem [resolvable:$true] %s44
      %50 = dma.hbm_to_vmem [thread:$0]  %s3, 4096, %s45, [#allocation6], 128, 128, 8
    $region17: #{tpu_custom_call.1} parent=1 // pred_fallthru
      _
    // Predicated region
    $region18: #{tpu_custom_call.1} parent=1 // pred_check
      _
    $region19: #{tpu_custom_call.1} parent=1 // pred_check_branch
      %52 = sbr.rel (0) target = $region21
    $region20: #{tpu_custom_call.1} parent=1 // pred_region
      _
    $region21: #{tpu_custom_call.1} parent=1 // pred_fallthru
      _
    // Predicated region
    $region22: #{tpu_custom_call.1} parent=1 // pred_check
      _
    $region23: #{tpu_custom_call.1} parent=1 // pred_check_branch
      %54 = sbr.rel (0) target = $region25
    $region24: #{tpu_custom_call.1} parent=1 // pred_region
      _
    $region25: #{tpu_custom_call.1} parent=1 // pred_fallthru
      _
    // Predicated region
    $region26: #{tpu_custom_call.1} parent=1 // pred_check
      _
    $region27: #{tpu_custom_call.1} parent=1 // pred_check_branch
      %56 = sbr.rel (0) target = $region29
    $region28: #{tpu_custom_call.1} parent=1 // pred_region
      _
    $region29: #{tpu_custom_call.1} parent=1 // pred_fallthru
      _
    // Predicated region
    $region30: #{tpu_custom_call.1} parent=1 // pred_check
      _
    $region31: #{tpu_custom_call.1} parent=1 // pred_check_branch
      %58 = sbr.rel (0) target = $region33
    $region32: #{tpu_custom_call.1} parent=1 // pred_region
      %59 = dma.done [#allocation4], 128
    $region33: #{tpu_custom_call.1} parent=1 // pred_fallthru
      _
    // Predicated region
    $region34: #{tpu_custom_call.1} parent=1 // pred_check
      _
    $region35: #{tpu_custom_call.1} parent=1 // pred_check_branch
      %61 = sbr.rel (0) target = $region37
    $region36: #{tpu_custom_call.1} parent=1 // pred_region
      %62 = dma.done [#allocation6], 768
    $region37: #{tpu_custom_call.1} parent=1 // pred_fallthru
      _
    // Predicated region
    $region38: #{tpu_custom_call.1} parent=1 // pred_check
      _
    $region39: #{tpu_custom_call.1} parent=1 // pred_check_branch
      %64 = sbr.rel (0) target = $region41
    $region40: #{tpu_custom_call.1} parent=1 // pred_region
      %65 = dma.done [#allocation6], 4096
    $region41: #{tpu_custom_call.1} parent=1 // pred_fallthru
      _
    %v66 = vld [vmem:[#allocation3] sm:$0xff]
    %v67 = vld [vmem:[#allocation5] sm:$0xff]
    %v68 = vld [vmem:[#allocation5 + $0x8] sm:$0xff]
    %v69 = vld [vmem:[#allocation5 + $0x10] sm:$0xff]
    %v70 = vld [vmem:[#allocation5 + $0x18] sm:$0xff]
    %v71 = vld [vmem:[#allocation5 + $0x20] sm:$0xff]
    %v72 = vld [vmem:[#allocation5 + $0x28] sm:$0xff]
    %v73 = vld [vmem:[%s2] sm:$0x3]
    %v75 = vlaneseq
    %v76 = vshrl.u32 %v75, 7
    %v77 = vsub.s32 0, %v76
    %v78 = vrot.slane %v73, %v77
    %v79 = vlaneseq
    %v80 = vshrl.u32 %v79, 7
    %v81 = vsub.s32 1, %v80
    %v82 = vrot.slane %v73, %v81
    %vm85 = vcmask 195584
    %v87 = vsel %vm85, %v66, 0
    %89 = vmatprep.subr.mxu0 %v68
    %90 = vmatpush1.msra.mxu0 %v67
    %91 = vmatprep.subr.mxu0 %v70
    %92 = vmatpush1.msra.mxu0 %v69
    %93 = vmatprep.subr.mxu0 %v72
    %94 = vmatpush1.msra.mxu0 %v71
    %95 = vmatprep.subr.mxu0 0.0
    %96 = vmatpush1.msra.mxu0 0.0
    %97 = vmatprep.subr.mxu0 0.0
    %98 = vmatpush1.msra.mxu0 0.0
    %99 = vmatprep.subr.mxu0 0.0
    %100 = vmatpush1.msra.mxu0 0.0
    %101 = vmatprep.subr.mxu0 0.0
    %102 = vmatpush1.msra.mxu0 0.0
    %103 = vmatprep.subr.mxu0 0.0
    %104 = vmatpush1.msra.mxu0 0.0
    %105 = vmatprep.subr.mxu0 0.0
    %106 = vmatpush1.msra.mxu0 0.0
    %107 = vmatprep.subr.mxu0 0.0
    %108 = vmatpush1.msra.mxu0 0.0
    %109 = vmatprep.subr.mxu0 0.0
    %110 = vmatpush1.msra.mxu0 0.0
    %111 = vmatprep.subr.mxu0 0.0
    %112 = vmatpush1.msra.mxu0 0.0
    %113 = vmatprep.subr.mxu0 0.0
    %114 = vmatpush1.msra.mxu0 0.0
    %115 = vmatprep.subr.mxu0 0.0
    %116 = vmatpush1.msra.mxu0 0.0
    %117 = vmatprep.subr.mxu0 0.0
    %118 = vmatpush1.msra.mxu0 0.0
    %119 = vmatprep.subr.mxu0 0.0
    %120 = vmatpush1.msra.mxu0 0.0
    %121 = vmatprep.subr.mxu0 0.0
    %122 = vmatpush1.msra.mxu0 0.0
    %123 = vmatprep.subr.mxu0 0.0
    %124 = vmatpush1.msra.mxu0 0.0
    %125 = vmatprep.subr.mxu0 0.0
    %126 = vmatpush1.msra.mxu0 0.0
    %127 = vmatprep.subr.mxu0 0.0
    %128 = vmatpush1.msra.mxu0 0.0
    %129 = vmatprep.subr.mxu0 0.0
    %130 = vmatpush1.msra.mxu0 0.0
    %131 = vmatprep.subr.mxu0 0.0
    %132 = vmatpush1.msra.mxu0 0.0
    %133 = vmatprep.subr.mxu0 0.0
    %134 = vmatpush1.msra.mxu0 0.0
    %135 = vmatprep.subr.mxu0 0.0
    %136 = vmatpush1.msra.mxu0 0.0
    %137 = vmatprep.subr.mxu0 0.0
    %138 = vmatpush1.msra.mxu0 0.0
    %139 = vmatprep.subr.mxu0 0.0
    %140 = vmatpush1.msra.mxu0 0.0
    %141 = vmatprep.subr.mxu0 0.0
    %142 = vmatpush1.msra.mxu0 0.0
    %143 = vmatprep.subr.mxu0 0.0
    %144 = vmatpush1.msra.mxu0 0.0
    %145 = vmatprep.subr.mxu0 0.0
    %146 = vmatpush1.msra.mxu0 0.0
    %147 = vmatprep.subr.mxu0 0.0
    %148 = vmatpush1.msra.mxu0 0.0
    %149 = vmatprep.subr.mxu0 0.0
    %150 = vmatpush1.msra.mxu0 0.0
    %151 = vmatprep.subr.mxu0 0.0
    %152 = vmatpush1.msra.mxu0 0.0
    %153 = vmatprep.mubr.f32.mxu0 0.0
    %154 = vmatmul.mubr.f32.gmra.mrb[0].mxu0 %v87
    %v155 = vpop.f32.mrb[0].mxu0
    %v156 = vadd.f32 %v78, %v155
    %v157 = vpop.f32.mrb[0].mxu0
    %v158 = vadd.f32 %v82, %v157
    %159 = vdwg.mxu0
    %v160 = vmax.f32 %v156, 0.0
    %v161 = vmax.f32 %v158, 0.0
    %v162 = vld [vmem:[#allocation7] sm:$0xff]
    %v163 = vld [vmem:[#allocation7 + $0x8] sm:$0xff]
    %v164 = vld [vmem:[#allocation7 + $0x10] sm:$0xff]
    %v165 = vld [vmem:[#allocation7 + $0x18] sm:$0xff]
    %v166 = vld [vmem:[#allocation7 + $0x20] sm:$0xff]
    %v167 = vld [vmem:[#allocation7 + $0x28] sm:$0xff]
    %v168 = vld [vmem:[#allocation7 + $0x30] sm:$0xff]
    %v169 = vld [vmem:[#allocation7 + $0x38] sm:$0xff]
    %v170 = vld [vmem:[#allocation7 + $0x40] sm:$0xff]
    %v171 = vld [vmem:[#allocation7 + $0x48] sm:$0xff]
    %v172 = vld [vmem:[#allocation7 + $0x50] sm:$0xff]
    %v173 = vld [vmem:[#allocation7 + $0x58] sm:$0xff]
    %v174 = vld [vmem:[#allocation7 + $0x60] sm:$0xff]
    %v175 = vld [vmem:[#allocation7 + $0x68] sm:$0xff]
    %v176 = vld [vmem:[#allocation7 + $0x70] sm:$0xff]
    %v177 = vld [vmem:[#allocation7 + $0x78] sm:$0xff]
    %v178 = vld [vmem:[#allocation7 + $0x80] sm:$0xff]
    %v179 = vld [vmem:[#allocation7 + $0x88] sm:$0xff]
    %v180 = vld [vmem:[#allocation7 + $0x90] sm:$0xff]
    %v181 = vld [vmem:[#allocation7 + $0x98] sm:$0xff]
    %v182 = vld [vmem:[#allocation7 + $0xa0] sm:$0xff]
    %v183 = vld [vmem:[#allocation7 + $0xa8] sm:$0xff]
    %v184 = vld [vmem:[#allocation7 + $0xb0] sm:$0xff]
    %v185 = vld [vmem:[#allocation7 + $0xb8] sm:$0xff]
    %v186 = vld [vmem:[#allocation7 + $0xc0] sm:$0xff]
    %v187 = vld [vmem:[#allocation7 + $0xc8] sm:$0xff]
    %v188 = vld [vmem:[#allocation7 + $0xd0] sm:$0xff]
    %v189 = vld [vmem:[#allocation7 + $0xd8] sm:$0xff]
    %v190 = vld [vmem:[#allocation7 + $0xe0] sm:$0xff]
    %v191 = vld [vmem:[#allocation7 + $0xe8] sm:$0xff]
    %v192 = vld [vmem:[#allocation7 + $0xf0] sm:$0xff]
    %v193 = vld [vmem:[#allocation7 + $0xf8] sm:$0xff]
    %v194 = vld [vmem:[%s4] sm:$0x1]
    %v196 = vlaneseq
    %v197 = vshrl.u32 %v196, 7
    %v198 = vsub.s32 0, %v197
    %v199 = vrot.slane %v194, %v198
    %201 = vmatprep.subr.mxu0 0.0
    %202 = vmatpush1.msra.mxu0 %v162
    %203 = vmatprep.subr.mxu0 0.0
    %204 = vmatpush1.msra.mxu0 %v163
    %205 = vmatprep.subr.mxu0 0.0
    %206 = vmatpush1.msra.mxu0 %v164
    %207 = vmatprep.subr.mxu0 0.0
    %208 = vmatpush1.msra.mxu0 %v165
    %209 = vmatprep.subr.mxu0 0.0
    %210 = vmatpush1.msra.mxu0 %v166
    %211 = vmatprep.subr.mxu0 0.0
    %212 = vmatpush1.msra.mxu0 %v167
    %213 = vmatprep.subr.mxu0 0.0
    %214 = vmatpush1.msra.mxu0 %v168
    %215 = vmatprep.subr.mxu0 0.0
    %216 = vmatpush1.msra.mxu0 %v169
    %217 = vmatprep.subr.mxu0 0.0
    %218 = vmatpush1.msra.mxu0 %v170
    %219 = vmatprep.subr.mxu0 0.0
    %220 = vmatpush1.msra.mxu0 %v171
    %221 = vmatprep.subr.mxu0 0.0
    %222 = vmatpush1.msra.mxu0 %v172
    %223 = vmatprep.subr.mxu0 0.0
    %224 = vmatpush1.msra.mxu0 %v173
    %225 = vmatprep.subr.mxu0 0.0
    %226 = vmatpush1.msra.mxu0 %v174
    %227 = vmatprep.subr.mxu0 0.0
    %228 = vmatpush1.msra.mxu0 %v175
    %229 = vmatprep.subr.mxu0 0.0
    %230 = vmatpush1.msra.mxu0 %v176
    %231 = vmatprep.subr.mxu0 0.0
    %232 = vmatpush1.msra.mxu0 %v177
    %233 = vmatprep.subr.mxu0 0.0
    %234 = vmatpush1.msra.mxu0 %v178
    %235 = vmatprep.subr.mxu0 0.0
    %236 = vmatpush1.msra.mxu0 %v179
    %237 = vmatprep.subr.mxu0 0.0
    %238 = vmatpush1.msra.mxu0 %v180
    %239 = vmatprep.subr.mxu0 0.0
    %240 = vmatpush1.msra.mxu0 %v181
    %241 = vmatprep.subr.mxu0 0.0
    %242 = vmatpush1.msra.mxu0 %v182
    %243 = vmatprep.subr.mxu0 0.0
    %244 = vmatpush1.msra.mxu0 %v183
    %245 = vmatprep.subr.mxu0 0.0
    %246 = vmatpush1.msra.mxu0 %v184
    %247 = vmatprep.subr.mxu0 0.0
    %248 = vmatpush1.msra.mxu0 %v185
    %249 = vmatprep.subr.mxu0 0.0
    %250 = vmatpush1.msra.mxu0 %v186
    %251 = vmatprep.subr.mxu0 0.0
    %252 = vmatpush1.msra.mxu0 %v187
    %253 = vmatprep.subr.mxu0 0.0
    %254 = vmatpush1.msra.mxu0 %v188
    %255 = vmatprep.subr.mxu0 0.0
    %256 = vmatpush1.msra.mxu0 %v189
    %257 = vmatprep.subr.mxu0 0.0
    %258 = vmatpush1.msra.mxu0 %v190
    %259 = vmatprep.subr.mxu0 0.0
    %260 = vmatpush1.msra.mxu0 %v191
    %261 = vmatprep.subr.mxu0 0.0
    %262 = vmatpush1.msra.mxu0 %v192
    %263 = vmatprep.subr.mxu0 0.0
    %264 = vmatpush1.msra.mxu0 %v193
    %265 = vmatprep.mubr.f32.mxu0 %v161
    %266 = vmatmul.mubr.f32.gmra.mrb[0].mxu0 %v160
    %v267 = vpop.f32.mrb[0].mxu0
    %v268 = vadd.f32 %v199, %v267
    %v269 = vpop.f32.mrb[0].mxu0
    %270 = vdwg.mxu0
    %v271 = vmax.f32 %v268, 0.0
    %v272 = vld [vmem:[%s5] sm:$0x1]
    %v274 = vlaneseq
    %v275 = vshrl.u32 %v274, 7
    %v276 = vsub.s32 0, %v275
    %v277 = vrot.slane %v272, %v276
    %v279 = vmul.f32 %v271, %v277
    %280 = vadd.xlane.f32.xlu0 %v279
    %v281 = vpop.xlane.xlu0 %280
    %s282 = sld [smem:[#allocation2]]
    %v283 = vstv %s282
    %v284 = vadd.f32 %v281, %v283
    %vm285 = vcmask 7168
    %286 = vst.msk [vmem:[%s7] sm:$0xff] %vm285, %v284
    // Predicated region
    $region42: #{tpu_custom_call.1} parent=1 // pred_check
      _
    $region43: #{tpu_custom_call.1} parent=1 // pred_check_branch
      %288 = sbr.rel (0) target = $region45
    $region44: #{tpu_custom_call.1} parent=1 // pred_region
      _
    $region45: #{tpu_custom_call.1} parent=1 // pred_fallthru
      _
    // Predicated region
    $region46: #{tpu_custom_call.1} parent=1 // pred_check
      _
    $region47: #{tpu_custom_call.1} parent=1 // pred_check_branch
      %290 = sbr.rel (0) target = $region49
    $region48: #{tpu_custom_call.1} parent=1 // pred_region
      _
    $region49: #{tpu_custom_call.1} parent=1 // pred_fallthru
      _
    %291 = vsyncpa [#allocation4], 1
    %292 = vsyncpa [#allocation6], 1

</llo_original>
